<compile_context>
chip_gen: v7x
topology: tpu7x:2x2x1
jax: 0.10.0
libtpu: 0.0.40
codegen_flags: <defaults>
</compile_context>

<pallas_src>
from functools import partial

import numpy as np
import jax
import jax.numpy as jnp
from jax.experimental import pallas as pl
from jax.experimental.pallas import tpu as pltpu


def _gelu_tanh(x):
    # tanh-approximate GELU, computed in f32.
    c = 0.7978845608028654  # sqrt(2/pi)
    return 0.5 * x * (1.0 + jnp.tanh(c * (x + 0.044715 * x * x * x)))


def _mlp_kernel(x_ref, w1_ref, b1_ref, w2_ref, b2_ref, o_ref, h_ref):
    """One grid step == one row-tile of tokens.

    x_ref:  (bm, C)   input tile
    w1_ref: (C, H)    fc1 weight (resident across steps)
    b1_ref: (1, H)    fc1 bias
    w2_ref: (H, O)    fc2 weight (resident across steps)
    b2_ref: (1, O)    fc2 bias
    o_ref:  (bm, O)   output tile
    h_ref:  (bm, H)   VMEM scratch for the hidden activation
    """
    h = jnp.dot(x_ref[...], w1_ref[...], preferred_element_type=jnp.float32)
    h = h + b1_ref[...].astype(jnp.float32)
    h = _gelu_tanh(h)
    # Dropout (drop=0.0 / eval) is identity.
    h_ref[...] = h.astype(h_ref.dtype)

    out = jnp.dot(h_ref[...], w2_ref[...], preferred_element_type=jnp.float32)
    out = out + b2_ref[...].astype(jnp.float32)
    o_ref[...] = out.astype(o_ref.dtype)


def mlp_pallas(x, w1, b1, w2, b2, *, block_m: int = 256, drop: float = 0.0,
               training: bool = False):
    """JAX/Pallas equivalent of Mlp.forward (inference / drop == 0.0 path).

    x:  (..., C)
    w1: (C, H), b1: (H,)   -- note: (in, out) layout, i.e. torch weight.T
    w2: (H, O), b2: (O,)
    """
    if drop != 0.0 and training:
        # TODO(synk): training-mode dropout not implemented (needs TPU PRNG).
        raise NotImplementedError("training-mode dropout (p>0) not supported")

    orig_shape = x.shape
    C = orig_shape[-1]
    M = int(np.prod(orig_shape[:-1])) if len(orig_shape) > 1 else 1
    H = w1.shape[1]
    O = w2.shape[1]

    x2 = x.reshape(M, C)

    # Row-tile size: full M when small, otherwise block_m (multiple of 8).
    bm = M if M <= block_m else block_m
    Mp = ((M + bm - 1) // bm) * bm
    if Mp != M:
        x2 = jnp.pad(x2, ((0, Mp - M), (0, 0)))
    grid = (Mp // bm,)

    b1_2 = b1.reshape(1, H)
    b2_2 = b2.reshape(1, O)

    itemsize = np.dtype(x.dtype).itemsize
    cost = pl.CostEstimate(
        flops=int(2 * Mp * H * (C + O)),
        transcendentals=int(Mp * H),
        bytes_accessed=int(
            (Mp * C + C * H + H + H * O + O + Mp * O) * itemsize),
    )

    out = pl.pallas_call(
        _mlp_kernel,
        out_shape=jax.ShapeDtypeStruct((Mp, O), x.dtype),
        grid_spec=pltpu.PrefetchScalarGridSpec(
            num_scalar_prefetch=0,
            grid=grid,
            in_specs=[
                pl.BlockSpec((bm, C), lambda i: (i, 0)),   # x tile
                pl.BlockSpec((C, H), lambda i: (0, 0)),    # W1 (resident)
                pl.BlockSpec((1, H), lambda i: (0, 0)),    # b1
                pl.BlockSpec((H, O), lambda i: (0, 0)),    # W2 (resident)
                pl.BlockSpec((1, O), lambda i: (0, 0)),    # b2
            ],
            out_specs=pl.BlockSpec((bm, O), lambda i: (i, 0)),
            scratch_shapes=[pltpu.VMEM((bm, H), x.dtype)],
        ),
        compiler_params=pltpu.CompilerParams(
            dimension_semantics=("parallel",),
        ),
        cost_estimate=cost,
    )(x2, w1, b1_2, w2, b2_2)

    if Mp != M:
        out = out[:M]
    return out.reshape(*orig_shape[:-1], O)


class Mlp:
    """Minimal stand-in for the nn.Module: holds params + drop prob."""

    def __init__(self, in_features, hidden_features=None, out_features=None,
                 drop: float = 0.0, *, key=None, dtype=jnp.float32):
        out_features = out_features or in_features
        hidden_features = hidden_features or in_features
        self.drop = float(drop)
        self.training = False
        if key is None:
            key = jax.random.PRNGKey(0)
        k1, k2, k3, k4 = jax.random.split(key, 4)
        s1 = 1.0 / np.sqrt(in_features)
        s2 = 1.0 / np.sqrt(hidden_features)
        # Stored in (in, out) layout (== torch weight.T).
        self.w1 = (jax.random.normal(k1, (in_features, hidden_features)) * s1).astype(dtype)
        self.b1 = (jax.random.normal(k2, (hidden_features,)) * s1).astype(dtype)
        self.w2 = (jax.random.normal(k3, (hidden_features, out_features)) * s2).astype(dtype)
        self.b2 = (jax.random.normal(k4, (out_features,)) * s2).astype(dtype)

    def __call__(self, x):
        return mlp_pallas(x, self.w1, self.b1, self.w2, self.b2,
                          drop=self.drop, training=self.training)


if __name__ == "__main__":
    key = jax.random.PRNGKey(0)
    kx, kp = jax.random.split(key)

    # Small ViT-style shapes: batch=2, seq=8, in=128, hidden=256, out=128.
    B, S, C, Hf = 2, 8, 128, 256
    x = jax.random.normal(kx, (B, S, C), dtype=jnp.float32)

    mlp = Mlp(in_features=C, hidden_features=Hf, drop=0.0, key=kp)

    y = mlp(x)
    y = jax.block_until_ready(y)

    # Pure-JAX reference (same tanh-approx GELU).
    x2 = x.reshape(B * S, C)
    h_ref = x2 @ mlp.w1 + mlp.b1
    h_ref = 0.5 * h_ref * (1.0 + jnp.tanh(0.7978845608028654 *
                                          (h_ref + 0.044715 * h_ref ** 3)))
    y_ref = (h_ref @ mlp.w2 + mlp.b2).reshape(B, S, -1)

    yn = np.asarray(y)
    rn = np.asarray(y_ref)
    assert yn.shape == (B, S, C), f"bad output shape {yn.shape}"
    assert np.allclose(yn, rn, rtol=2e-2, atol=2e-2), (
        f"max abs diff {np.max(np.abs(yn - rn))}")

    print("KERNEL_OK")
</pallas_src>

<mosaic_0001>
module attributes {stable_mosaic.version = 11 : i64} {
  func.func @_mlp_kernel(%arg0: i32, %arg1: memref<16x128xf32, #tpu.memory_space<vmem>>, %arg2: memref<128x256xf32, #tpu.memory_space<vmem>>, %arg3: memref<1x256xf32, #tpu.memory_space<vmem>>, %arg4: memref<256x128xf32, #tpu.memory_space<vmem>>, %arg5: memref<1x128xf32, #tpu.memory_space<vmem>>, %arg6: memref<16x128xf32, #tpu.memory_space<vmem>>, %arg7: memref<16x256xf32, #tpu.memory_space<vmem>>) attributes {dimension_semantics = [#tpu.dimension_semantics<parallel>], iteration_bounds = array<i64: 1>, scalar_prefetch = 0 : i64, scratch_operands = 1 : i64, tpu.core_type = #tpu.core_type<tc>, window_params = [{transform_indices = @transform_0, window_bounds = array<i64: 16, 128>}, {pipeline_mode = #tpu.pipeline_mode<synchronous>, transform_indices = @transform_1, window_bounds = array<i64: 128, 256>}, {pipeline_mode = #tpu.pipeline_mode<synchronous>, transform_indices = @transform_2, window_bounds = array<i64: 1, 256>}, {pipeline_mode = #tpu.pipeline_mode<synchronous>, transform_indices = @transform_3, window_bounds = array<i64: 256, 128>}, {pipeline_mode = #tpu.pipeline_mode<synchronous>, transform_indices = @transform_4, window_bounds = array<i64: 1, 128>}, {transform_indices = @transform_5, window_bounds = array<i64: 16, 128>}]} {
    %c0 = arith.constant 0 : index
    %c0_0 = arith.constant 0 : index
    %0 = vector.load %arg1[%c0, %c0_0] : memref<16x128xf32, #tpu.memory_space<vmem>>, vector<16x128xf32>
    %c0_1 = arith.constant 0 : index
    %c0_2 = arith.constant 0 : index
    %1 = vector.load %arg2[%c0_1, %c0_2] : memref<128x256xf32, #tpu.memory_space<vmem>>, vector<128x256xf32>
    %cst = arith.constant dense<0.000000e+00> : vector<16x256xf32>
    %2 = tpu.matmul %0, %1, %cst {dimension_numbers = #tpu.dot_dimension_numbers<[1], [0], [0], [1], [0, 0, 1, 1], [], []>} : vector<16x128xf32>, vector<128x256xf32>, vector<16x256xf32> -> vector<16x256xf32>
    %c0_3 = arith.constant 0 : index
    %c0_4 = arith.constant 0 : index
    %3 = vector.load %arg3[%c0_3, %c0_4] : memref<1x256xf32, #tpu.memory_space<vmem>>, vector<1x256xf32>
    %4 = vector.broadcast %3 : vector<1x256xf32> to vector<16x256xf32>
    %5 = arith.addf %2, %4 : vector<16x256xf32>
    %cst_5 = arith.constant 5.000000e-01 : f32
    %6 = vector.broadcast %cst_5 : f32 to vector<16x256xf32>
    %7 = arith.mulf %6, %5 : vector<16x256xf32>
    %cst_6 = arith.constant 4.471500e-02 : f32
    %8 = vector.broadcast %cst_6 : f32 to vector<16x256xf32>
    %9 = arith.mulf %8, %5 : vector<16x256xf32>
    %10 = arith.mulf %9, %5 : vector<16x256xf32>
    %11 = arith.mulf %10, %5 : vector<16x256xf32>
    %12 = arith.addf %5, %11 : vector<16x256xf32>
    %cst_7 = arith.constant 0.797884583 : f32
    %13 = vector.broadcast %cst_7 : f32 to vector<16x256xf32>
    %14 = arith.mulf %13, %12 : vector<16x256xf32>
    %15 = math.tanh %14 : vector<16x256xf32>
    %cst_8 = arith.constant 1.000000e+00 : f32
    %16 = vector.broadcast %cst_8 : f32 to vector<16x256xf32>
    %17 = arith.addf %16, %15 : vector<16x256xf32>
    %18 = arith.mulf %7, %17 : vector<16x256xf32>
    %c0_9 = arith.constant 0 : index
    %c0_10 = arith.constant 0 : index
    %19 = vector.load %arg7[%c0_9, %c0_10] : memref<16x256xf32, #tpu.memory_space<vmem>>, vector<16x256xf32>
    tpu.vector_store %arg7[%c0_9, %c0_10], %18 {strides = array<i32>} : memref<16x256xf32, #tpu.memory_space<vmem>>, vector<16x256xf32>,
    %c0_11 = arith.constant 0 : index
    %c0_12 = arith.constant 0 : index
    %20 = vector.load %arg7[%c0_11, %c0_12] : memref<16x256xf32, #tpu.memory_space<vmem>>, vector<16x256xf32>
    %c0_13 = arith.constant 0 : index
    %c0_14 = arith.constant 0 : index
    %21 = vector.load %arg4[%c0_13, %c0_14] : memref<256x128xf32, #tpu.memory_space<vmem>>, vector<256x128xf32>
    %cst_15 = arith.constant dense<0.000000e+00> : vector<16x128xf32>
    %22 = tpu.matmul %20, %21, %cst_15 {dimension_numbers = #tpu.dot_dimension_numbers<[1], [0], [0], [1], [0, 0, 1, 1], [], []>} : vector<16x256xf32>, vector<256x128xf32>, vector<16x128xf32> -> vector<16x128xf32>
    %c0_16 = arith.constant 0 : index
    %c0_17 = arith.constant 0 : index
    %23 = vector.load %arg5[%c0_16, %c0_17] : memref<1x128xf32, #tpu.memory_space<vmem>>, vector<1x128xf32>
    %24 = vector.broadcast %23 : vector<1x128xf32> to vector<16x128xf32>
    %25 = arith.addf %22, %24 : vector<16x128xf32>
    %c0_18 = arith.constant 0 : index
    %c0_19 = arith.constant 0 : index
    %26 = vector.load %arg6[%c0_18, %c0_19] : memref<16x128xf32, #tpu.memory_space<vmem>>, vector<16x128xf32>
    tpu.vector_store %arg6[%c0_18, %c0_19], %25 {strides = array<i32>} : memref<16x128xf32, #tpu.memory_space<vmem>>, vector<16x128xf32>,
    return
  }
  func.func @transform_0(%arg0: i32) -> (i32, i32) {
    %c0_i32 = arith.constant 0 : i32
    %c0_i32_0 = arith.constant 0 : i32
    return %arg0, %c0_i32 : i32, i32
  }
  func.func @transform_1(%arg0: i32) -> (i32, i32) {
    %c0_i32 = arith.constant 0 : i32
    %c0_i32_0 = arith.constant 0 : i32
    %c0_i32_1 = arith.constant 0 : i32
    return %c0_i32, %c0_i32_0 : i32, i32
  }
  func.func @transform_2(%arg0: i32) -> (i32, i32) {
    %c0_i32 = arith.constant 0 : i32
    %c0_i32_0 = arith.constant 0 : i32
    %c0_i32_1 = arith.constant 0 : i32
    return %c0_i32, %c0_i32_0 : i32, i32
  }
  func.func @transform_3(%arg0: i32) -> (i32, i32) {
    %c0_i32 = arith.constant 0 : i32
    %c0_i32_0 = arith.constant 0 : i32
    %c0_i32_1 = arith.constant 0 : i32
    return %c0_i32, %c0_i32_0 : i32, i32
  }
  func.func @transform_4(%arg0: i32) -> (i32, i32) {
    %c0_i32 = arith.constant 0 : i32
    %c0_i32_0 = arith.constant 0 : i32
    %c0_i32_1 = arith.constant 0 : i32
    return %c0_i32, %c0_i32_0 : i32, i32
  }
  func.func @transform_5(%arg0: i32) -> (i32, i32) {
    %c0_i32 = arith.constant 0 : i32
    %c0_i32_0 = arith.constant 0 : i32
    return %arg0, %c0_i32 : i32, i32
  }
}

</mosaic_0001>

<llo_original>
// kernel: tpu_custom_call.1
$region0: #{tpu_custom_call.1}
  #allocation0 [shape = 'u32[]', space=smem, size = 0x4, offset = 0x4, fixed_abs, tag = 'smem constant byte address 0x4 - core index']
  #allocation1 [shape = 'u32[144,128]{1,0:T(1,128)}', space=vmem, size = 0x12000, scoped, tag = 'internal scratch']
  #allocation2 [shape = 'f32[16,256]{1,0:T(8,128)}', space=vmem, size = 0x4000, scoped, tag = 'scratch operand']
  %s0 = inlined_call_operand.hbm [shape: f32[16,128], index: 0, kind: input, shape index: {}]
  %s1 = inlined_call_operand.hbm [shape: f32[128,256], index: 1, kind: input, shape index: {}]
  %s2 = inlined_call_operand.vmem [shape: f32[1,256], index: 2, kind: input, shape index: {}]
  %s3 = inlined_call_operand.hbm [shape: f32[256,128], index: 3, kind: input, shape index: {}]
  %s4 = inlined_call_operand.vmem [shape: f32[1,128], index: 4, kind: input, shape index: {}]
  %s5 = inlined_call_operand.hbm [shape: f32[16,128], index: 5, kind: output, shape index: {}]
  %s6 = sld [smem:[#allocation0]]
  $region42: #{tpu_custom_call.1} parent=0
    _
  %s8 = ssub.s32 1, %s6
  %s9 = scalar_select 0, %s8, %s6
  $region1: #{tpu_custom_call.1} parent=0
    #allocation3 [shape = 'u8[8192]{0}', space=vmem, size = 0x2000, scoped, tag = 'input window, operand 0, single buffered']
    #allocation4 [shape = 's32[1]{0}', space=sflag, size = 0x4, scoped, tag = 'scoped memory for tpu_custom_call.1']
    #allocation5 [shape = 's32[1]{0}', space=sflag, size = 0x4, scoped, tag = 'scoped memory for tpu_custom_call.1']
    #allocation6 [shape = 'u8[131072]{0}', space=vmem, size = 0x20000, scoped, tag = 'input window, operand 1, single buffered']
    #allocation7 [shape = 's32[1]{0}', space=sflag, size = 0x4, scoped, tag = 'scoped memory for tpu_custom_call.1']
    #allocation8 [shape = 'u8[131072]{0}', space=vmem, size = 0x20000, scoped, tag = 'input window, operand 3, single buffered']
    #allocation9 [shape = 'u8[8192]{0}', space=vmem, size = 0x2000, scoped, tag = 'output window, operand 0, single buffered']
    %10 = vsyncpa [#allocation4], 0
    %11 = vsyncpa [#allocation7], 0
    %12 = vsyncpa [#allocation5], 0
    // Predicated region
    $region2: #{tpu_custom_call.1} parent=1 // pred_check
      _
    $region3: #{tpu_custom_call.1} parent=1 // pred_check_branch
      %14 = sbr.rel (0) target = $region5
    $region4: #{tpu_custom_call.1} parent=1 // pred_region
      %s16 = ssub.s32 256, 256
      %17 = vsyncadd [#allocation4], %s16
      %s18 = sshll.u32 [#allocation3], 4
      %s19 = int_to_ptr.vmem [resolvable:$true] %s18
      %24 = dma.hbm_to_vmem [thread:$0]  %s0, 256, %s19, [#allocation4], 128, 128, 8
    $region5: #{tpu_custom_call.1} parent=1 // pred_fallthru
      _
    // Predicated region
    $region6: #{tpu_custom_call.1} parent=1 // pred_check
      _
    $region7: #{tpu_custom_call.1} parent=1 // pred_check_branch
      %26 = sbr.rel (0) target = $region9
    $region8: #{tpu_custom_call.1} parent=1 // pred_region
      %s28 = ssub.s32 4096, 4096
      %29 = vsyncadd [#allocation7], %s28
      %s30 = sshll.u32 [#allocation6], 4
      %s31 = int_to_ptr.vmem [resolvable:$true] %s30
      %36 = dma.hbm_to_vmem [thread:$0]  %s1, 4096, %s31, [#allocation7], 256, 256, 16
    $region9: #{tpu_custom_call.1} parent=1 // pred_fallthru
      _
    // Predicated region
    $region10: #{tpu_custom_call.1} parent=1 // pred_check
      _
    $region11: #{tpu_custom_call.1} parent=1 // pred_check_branch
      %38 = sbr.rel (0) target = $region13
    $region12: #{tpu_custom_call.1} parent=1 // pred_region
      _
    $region13: #{tpu_custom_call.1} parent=1 // pred_fallthru
      _
    // Predicated region
    $region14: #{tpu_custom_call.1} parent=1 // pred_check
      _
    $region15: #{tpu_custom_call.1} parent=1 // pred_check_branch
      %40 = sbr.rel (0) target = $region17
    $region16: #{tpu_custom_call.1} parent=1 // pred_region
      %s42 = ssub.s32 4096, 4096
      %43 = vsyncadd [#allocation7], %s42
      %s44 = sshll.u32 [#allocation8], 4
      %s45 = int_to_ptr.vmem [resolvable:$true] %s44
      %50 = dma.hbm_to_vmem [thread:$0]  %s3, 4096, %s45, [#allocation7], 128, 128, 8
    $region17: #{tpu_custom_call.1} parent=1 // pred_fallthru
      _
    // Predicated region
    $region18: #{tpu_custom_call.1} parent=1 // pred_check
      _
    $region19: #{tpu_custom_call.1} parent=1 // pred_check_branch
      %52 = sbr.rel (0) target = $region21
    $region20: #{tpu_custom_call.1} parent=1 // pred_region
      _
    $region21: #{tpu_custom_call.1} parent=1 // pred_fallthru
      _
    // Predicated region
    $region22: #{tpu_custom_call.1} parent=1 // pred_check
      _
    $region23: #{tpu_custom_call.1} parent=1 // pred_check_branch
      %54 = sbr.rel (0) target = $region25
    $region24: #{tpu_custom_call.1} parent=1 // pred_region
      %55 = dma.done [#allocation4], 256
    $region25: #{tpu_custom_call.1} parent=1 // pred_fallthru
      _
    // Predicated region
    $region26: #{tpu_custom_call.1} parent=1 // pred_check
      _
    $region27: #{tpu_custom_call.1} parent=1 // pred_check_branch
      %57 = sbr.rel (0) target = $region29
    $region28: #{tpu_custom_call.1} parent=1 // pred_region
      %58 = dma.done [#allocation7], 4096
    $region29: #{tpu_custom_call.1} parent=1 // pred_fallthru
      _
    // Predicated region
    $region30: #{tpu_custom_call.1} parent=1 // pred_check
      _
    $region31: #{tpu_custom_call.1} parent=1 // pred_check_branch
      %60 = sbr.rel (0) target = $region33
    $region32: #{tpu_custom_call.1} parent=1 // pred_region
      %61 = dma.done [#allocation7], 4096
    $region33: #{tpu_custom_call.1} parent=1 // pred_fallthru
      _
    %v62 = vld [vmem:[#allocation3] sm:$0xff]
    %v63 = vld [vmem:[#allocation3 + $0x8] sm:$0xff]
    %v64 = vld [vmem:[#allocation6] sm:$0xff]
    %v65 = vld [vmem:[#allocation6 + $0x8] sm:$0xff]
    %v66 = vld [vmem:[#allocation6 + $0x10] sm:$0xff]
    %v67 = vld [vmem:[#allocation6 + $0x18] sm:$0xff]
    %v68 = vld [vmem:[#allocation6 + $0x20] sm:$0xff]
    %v69 = vld [vmem:[#allocation6 + $0x28] sm:$0xff]
    %v70 = vld [vmem:[#allocation6 + $0x30] sm:$0xff]
    %v71 = vld [vmem:[#allocation6 + $0x38] sm:$0xff]
    %v72 = vld [vmem:[#allocation6 + $0x40] sm:$0xff]
    %v73 = vld [vmem:[#allocation6 + $0x48] sm:$0xff]
    %v74 = vld [vmem:[#allocation6 + $0x50] sm:$0xff]
    %v75 = vld [vmem:[#allocation6 + $0x58] sm:$0xff]
    %v76 = vld [vmem:[#allocation6 + $0x60] sm:$0xff]
    %v77 = vld [vmem:[#allocation6 + $0x68] sm:$0xff]
    %v78 = vld [vmem:[#allocation6 + $0x70] sm:$0xff]
    %v79 = vld [vmem:[#allocation6 + $0x78] sm:$0xff]
    %v80 = vld [vmem:[#allocation6 + $0x80] sm:$0xff]
    %v81 = vld [vmem:[#allocation6 + $0x88] sm:$0xff]
    %v82 = vld [vmem:[#allocation6 + $0x90] sm:$0xff]
    %v83 = vld [vmem:[#allocation6 + $0x98] sm:$0xff]
    %v84 = vld [vmem:[#allocation6 + $0xa0] sm:$0xff]
    %v85 = vld [vmem:[#allocation6 + $0xa8] sm:$0xff]
    %v86 = vld [vmem:[#allocation6 + $0xb0] sm:$0xff]
    %v87 = vld [vmem:[#allocation6 + $0xb8] sm:$0xff]
    %v88 = vld [vmem:[#allocation6 + $0xc0] sm:$0xff]
    %v89 = vld [vmem:[#allocation6 + $0xc8] sm:$0xff]
    %v90 = vld [vmem:[#allocation6 + $0xd0] sm:$0xff]
    %v91 = vld [vmem:[#allocation6 + $0xd8] sm:$0xff]
    %v92 = vld [vmem:[#allocation6 + $0xe0] sm:$0xff]
    %v93 = vld [vmem:[#allocation6 + $0xe8] sm:$0xff]
    %v94 = vld [vmem:[#allocation6 + $0xf0] sm:$0xff]
    %v95 = vld [vmem:[#allocation6 + $0xf8] sm:$0xff]
    %v96 = vld [vmem:[%s2] sm:$0x3]
    %v98 = vlaneseq
    %v99 = vshrl.u32 %v98, 7
    %v100 = vsub.s32 0, %v99
    %v101 = vrot.slane %v96, %v100
    %v102 = vlaneseq
    %v103 = vshrl.u32 %v102, 7
    %v104 = vsub.s32 1, %v103
    %v105 = vrot.slane %v96, %v104
    %108 = vmatprep.subr.mxu0 %v65
    %109 = vmatpush1.msra.mxu0 %v64
    %110 = vmatprep.subr.mxu0 %v67
    %111 = vmatpush1.msra.mxu0 %v66
    %112 = vmatprep.subr.mxu0 %v69
    %113 = vmatpush1.msra.mxu0 %v68
    %114 = vmatprep.subr.mxu0 %v71
    %115 = vmatpush1.msra.mxu0 %v70
    %116 = vmatprep.subr.mxu0 %v73
    %117 = vmatpush1.msra.mxu0 %v72
    %118 = vmatprep.subr.mxu0 %v75
    %119 = vmatpush1.msra.mxu0 %v74
    %120 = vmatprep.subr.mxu0 %v77
    %121 = vmatpush1.msra.mxu0 %v76
    %122 = vmatprep.subr.mxu0 %v79
    %123 = vmatpush1.msra.mxu0 %v78
    %124 = vmatprep.subr.mxu0 %v81
    %125 = vmatpush1.msra.mxu0 %v80
    %126 = vmatprep.subr.mxu0 %v83
    %127 = vmatpush1.msra.mxu0 %v82
    %128 = vmatprep.subr.mxu0 %v85
    %129 = vmatpush1.msra.mxu0 %v84
    %130 = vmatprep.subr.mxu0 %v87
    %131 = vmatpush1.msra.mxu0 %v86
    %132 = vmatprep.subr.mxu0 %v89
    %133 = vmatpush1.msra.mxu0 %v88
    %134 = vmatprep.subr.mxu0 %v91
    %135 = vmatpush1.msra.mxu0 %v90
    %136 = vmatprep.subr.mxu0 %v93
    %137 = vmatpush1.msra.mxu0 %v92
    %138 = vmatprep.subr.mxu0 %v95
    %139 = vmatpush1.msra.mxu0 %v94
    %140 = vmatprep.subr.mxu0 0.0
    %141 = vmatpush1.msra.mxu0 0.0
    %142 = vmatprep.subr.mxu0 0.0
    %143 = vmatpush1.msra.mxu0 0.0
    %144 = vmatprep.subr.mxu0 0.0
    %145 = vmatpush1.msra.mxu0 0.0
    %146 = vmatprep.subr.mxu0 0.0
    %147 = vmatpush1.msra.mxu0 0.0
    %148 = vmatprep.subr.mxu0 0.0
    %149 = vmatpush1.msra.mxu0 0.0
    %150 = vmatprep.subr.mxu0 0.0
    %151 = vmatpush1.msra.mxu0 0.0
    %152 = vmatprep.subr.mxu0 0.0
    %153 = vmatpush1.msra.mxu0 0.0
    %154 = vmatprep.subr.mxu0 0.0
    %155 = vmatpush1.msra.mxu0 0.0
    %156 = vmatprep.subr.mxu0 0.0
    %157 = vmatpush1.msra.mxu0 0.0
    %158 = vmatprep.subr.mxu0 0.0
    %159 = vmatpush1.msra.mxu0 0.0
    %160 = vmatprep.subr.mxu0 0.0
    %161 = vmatpush1.msra.mxu0 0.0
    %162 = vmatprep.subr.mxu0 0.0
    %163 = vmatpush1.msra.mxu0 0.0
    %164 = vmatprep.subr.mxu0 0.0
    %165 = vmatpush1.msra.mxu0 0.0
    %166 = vmatprep.subr.mxu0 0.0
    %167 = vmatpush1.msra.mxu0 0.0
    %168 = vmatprep.subr.mxu0 0.0
    %169 = vmatpush1.msra.mxu0 0.0
    %170 = vmatprep.subr.mxu0 0.0
    %171 = vmatpush1.msra.mxu0 0.0
    %172 = vmatprep.mubr.f32.mxu0 0.0
    %173 = vmatmul.mubr.f32.gmra.mrb[0].mxu0 %v62
    %v174 = vpop.f32.mrb[0].mxu0
    %v175 = vadd.f32 %v101, %v174
    %v176 = vpop.f32.mrb[0].mxu0
    %v177 = vadd.f32 %v105, %v176
    %178 = vmatprep.mubr.f32.mxu0 0.0
    %179 = vmatmul.mubr.f32.gmra.mrb[0].mxu0 %v63
    %v180 = vpop.f32.mrb[0].mxu0
    %v181 = vadd.f32 %v101, %v180
    %v182 = vpop.f32.mrb[0].mxu0
    %v183 = vadd.f32 %v105, %v182
    %184 = vdwg.mxu0
    %v185 = vmul.f32 %v175, 0.5
    %v186 = vmul.f32 %v177, 0.5
    %v187 = vmul.f32 %v181, 0.5
    %v188 = vmul.f32 %v183, 0.5
    %v189 = vmul.f32 %v175, 0.044715
    %v190 = vmul.f32 %v177, 0.044715
    %v191 = vmul.f32 %v181, 0.044715
    %v192 = vmul.f32 %v183, 0.044715
    %v193 = vmul.f32 %v189, %v175
    %v194 = vmul.f32 %v190, %v177
    %v195 = vmul.f32 %v191, %v181
    %v196 = vmul.f32 %v192, %v183
    %v197 = vmul.f32 %v193, %v175
    %v198 = vmul.f32 %v194, %v177
    %v199 = vmul.f32 %v195, %v181
    %v200 = vmul.f32 %v196, %v183
    %v201 = vadd.f32 %v175, %v197
    %v202 = vadd.f32 %v177, %v198
    %v203 = vadd.f32 %v181, %v199
    %v204 = vadd.f32 %v183, %v200
    %v205 = vmul.f32 %v201, 0.7978846
    %v206 = vmul.f32 %v202, 0.7978846
    %v207 = vmul.f32 %v203, 0.7978846
    %v208 = vmul.f32 %v204, 0.7978846
    %v209 = vtanh.pop %v205
    %v210 = vtanh.pop %v206
    %v211 = vtanh.pop %v207
    %v212 = vtanh.pop %v208
    %v213 = vadd.f32 %v209, 1.0
    %v214 = vadd.f32 %v210, 1.0
    %v215 = vadd.f32 %v211, 1.0
    %v216 = vadd.f32 %v212, 1.0
    %v217 = vmul.f32 %v185, %v213
    %v218 = vmul.f32 %v186, %v214
    %v219 = vmul.f32 %v187, %v215
    %v220 = vmul.f32 %v188, %v216
    %221 = vst [vmem:[#allocation2] sm:$0xff] %v217
    %222 = vst [vmem:[#allocation2 + $0x8] sm:$0xff] %v218
    %223 = vst [vmem:[#allocation2 + $0x10] sm:$0xff] %v219
    %224 = vst [vmem:[#allocation2 + $0x18] sm:$0xff] %v220
    %v225 = vld [vmem:[#allocation2] sm:$0xff]
    %v226 = vld [vmem:[#allocation2 + $0x8] sm:$0xff]
    %v227 = vld [vmem:[#allocation2 + $0x10] sm:$0xff]
    %v228 = vld [vmem:[#allocation2 + $0x18] sm:$0xff]
    %v229 = vld [vmem:[#allocation8] sm:$0xff]
    %v230 = vld [vmem:[#allocation8 + $0x8] sm:$0xff]
    %v231 = vld [vmem:[#allocation8 + $0x10] sm:$0xff]
    %v232 = vld [vmem:[#allocation8 + $0x18] sm:$0xff]
    %v233 = vld [vmem:[#allocation8 + $0x20] sm:$0xff]
    %v234 = vld [vmem:[#allocation8 + $0x28] sm:$0xff]
    %v235 = vld [vmem:[#allocation8 + $0x30] sm:$0xff]
    %v236 = vld [vmem:[#allocation8 + $0x38] sm:$0xff]
    %v237 = vld [vmem:[#allocation8 + $0x40] sm:$0xff]
    %v238 = vld [vmem:[#allocation8 + $0x48] sm:$0xff]
    %v239 = vld [vmem:[#allocation8 + $0x50] sm:$0xff]
    %v240 = vld [vmem:[#allocation8 + $0x58] sm:$0xff]
    %v241 = vld [vmem:[#allocation8 + $0x60] sm:$0xff]
    %v242 = vld [vmem:[#allocation8 + $0x68] sm:$0xff]
    %v243 = vld [vmem:[#allocation8 + $0x70] sm:$0xff]
    %v244 = vld [vmem:[#allocation8 + $0x78] sm:$0xff]
    %v245 = vld [vmem:[#allocation8 + $0x80] sm:$0xff]
    %v246 = vld [vmem:[#allocation8 + $0x88] sm:$0xff]
    %v247 = vld [vmem:[#allocation8 + $0x90] sm:$0xff]
    %v248 = vld [vmem:[#allocation8 + $0x98] sm:$0xff]
    %v249 = vld [vmem:[#allocation8 + $0xa0] sm:$0xff]
    %v250 = vld [vmem:[#allocation8 + $0xa8] sm:$0xff]
    %v251 = vld [vmem:[#allocation8 + $0xb0] sm:$0xff]
    %v252 = vld [vmem:[#allocation8 + $0xb8] sm:$0xff]
    %v253 = vld [vmem:[#allocation8 + $0xc0] sm:$0xff]
    %v254 = vld [vmem:[#allocation8 + $0xc8] sm:$0xff]
    %v255 = vld [vmem:[#allocation8 + $0xd0] sm:$0xff]
    %v256 = vld [vmem:[#allocation8 + $0xd8] sm:$0xff]
    %v257 = vld [vmem:[#allocation8 + $0xe0] sm:$0xff]
    %v258 = vld [vmem:[#allocation8 + $0xe8] sm:$0xff]
    %v259 = vld [vmem:[#allocation8 + $0xf0] sm:$0xff]
    %v260 = vld [vmem:[#allocation8 + $0xf8] sm:$0xff]
    %v261 = vld [vmem:[%s4] sm:$0x1]
    %v263 = vlaneseq
    %v264 = vshrl.u32 %v263, 7
    %v265 = vsub.s32 0, %v264
    %v266 = vrot.slane %v261, %v265
    %268 = vmatprep.subr.mxu0 0.0
    %269 = vmatpush1.msra.mxu0 %v229
    %270 = vmatprep.subr.mxu0 0.0
    %271 = vmatpush1.msra.mxu0 %v230
    %272 = vmatprep.subr.mxu0 0.0
    %273 = vmatpush1.msra.mxu0 %v231
    %274 = vmatprep.subr.mxu0 0.0
    %275 = vmatpush1.msra.mxu0 %v232
    %276 = vmatprep.subr.mxu0 0.0
    %277 = vmatpush1.msra.mxu0 %v233
    %278 = vmatprep.subr.mxu0 0.0
    %279 = vmatpush1.msra.mxu0 %v234
    %280 = vmatprep.subr.mxu0 0.0
    %281 = vmatpush1.msra.mxu0 %v235
    %282 = vmatprep.subr.mxu0 0.0
    %283 = vmatpush1.msra.mxu0 %v236
    %284 = vmatprep.subr.mxu0 0.0
    %285 = vmatpush1.msra.mxu0 %v237
    %286 = vmatprep.subr.mxu0 0.0
    %287 = vmatpush1.msra.mxu0 %v238
    %288 = vmatprep.subr.mxu0 0.0
    %289 = vmatpush1.msra.mxu0 %v239
    %290 = vmatprep.subr.mxu0 0.0
    %291 = vmatpush1.msra.mxu0 %v240
    %292 = vmatprep.subr.mxu0 0.0
    %293 = vmatpush1.msra.mxu0 %v241
    %294 = vmatprep.subr.mxu0 0.0
    %295 = vmatpush1.msra.mxu0 %v242
    %296 = vmatprep.subr.mxu0 0.0
    %297 = vmatpush1.msra.mxu0 %v243
    %298 = vmatprep.subr.mxu0 0.0
    %299 = vmatpush1.msra.mxu0 %v244
    %300 = vmatprep.subr.mxu0 0.0
    %301 = vmatpush1.msra.mxu0 %v245
    %302 = vmatprep.subr.mxu0 0.0
    %303 = vmatpush1.msra.mxu0 %v246
    %304 = vmatprep.subr.mxu0 0.0
    %305 = vmatpush1.msra.mxu0 %v247
    %306 = vmatprep.subr.mxu0 0.0
    %307 = vmatpush1.msra.mxu0 %v248
    %308 = vmatprep.subr.mxu0 0.0
    %309 = vmatpush1.msra.mxu0 %v249
    %310 = vmatprep.subr.mxu0 0.0
    %311 = vmatpush1.msra.mxu0 %v250
    %312 = vmatprep.subr.mxu0 0.0
    %313 = vmatpush1.msra.mxu0 %v251
    %314 = vmatprep.subr.mxu0 0.0
    %315 = vmatpush1.msra.mxu0 %v252
    %316 = vmatprep.subr.mxu0 0.0
    %317 = vmatpush1.msra.mxu0 %v253
    %318 = vmatprep.subr.mxu0 0.0
    %319 = vmatpush1.msra.mxu0 %v254
    %320 = vmatprep.subr.mxu0 0.0
    %321 = vmatpush1.msra.mxu0 %v255
    %322 = vmatprep.subr.mxu0 0.0
    %323 = vmatpush1.msra.mxu0 %v256
    %324 = vmatprep.subr.mxu0 0.0
    %325 = vmatpush1.msra.mxu0 %v257
    %326 = vmatprep.subr.mxu0 0.0
    %327 = vmatpush1.msra.mxu0 %v258
    %328 = vmatprep.subr.mxu0 0.0
    %329 = vmatpush1.msra.mxu0 %v259
    %330 = vmatprep.subr.mxu0 0.0
    %331 = vmatpush1.msra.mxu0 %v260
    %332 = vmatprep.mubr.f32.mxu0 %v226
    %333 = vmatmul.mubr.f32.gmra.mrb[0].mxu0 %v225
    %v334 = vpop.f32.mrb[0].mxu0
    %v335 = vadd.f32 %v266, %v334
    %v336 = vpop.f32.mrb[0].mxu0
    %337 = vmatprep.mubr.f32.mxu0 %v228
    %338 = vmatmul.mubr.f32.gmra.mrb[0].mxu0 %v227
    %v339 = vpop.f32.mrb[0].mxu0
    %v340 = vadd.f32 %v266, %v339
    %v341 = vpop.f32.mrb[0].mxu0
    %342 = vdwg.mxu0
    %343 = vst [vmem:[#allocation9] sm:$0xff] %v335
    %344 = vst [vmem:[#allocation9 + $0x8] sm:$0xff] %v340
    // Predicated region
    $region34: #{tpu_custom_call.1} parent=1 // pred_check
      _
    $region35: #{tpu_custom_call.1} parent=1 // pred_check_branch
      %346 = sbr.rel (0) target = $region37
    $region36: #{tpu_custom_call.1} parent=1 // pred_region
      %s348 = ssub.s32 256, 256
      %349 = vsyncadd [#allocation5], %s348
      %s350 = sshll.u32 [#allocation9], 4
      %s351 = int_to_ptr.vmem [resolvable:$true] %s350
      %356 = dma.vmem_to_hbm [thread:$0]  %s351, 256, %s5, [#allocation5], 128, 128, 8
    $region37: #{tpu_custom_call.1} parent=1 // pred_fallthru
      _
    // Predicated region
    $region38: #{tpu_custom_call.1} parent=1 // pred_check
      _
    $region39: #{tpu_custom_call.1} parent=1 // pred_check_branch
      %358 = sbr.rel (0) target = $region41
    $region40: #{tpu_custom_call.1} parent=1 // pred_region
      %359 = dma.done [#allocation5], 256
    $region41: #{tpu_custom_call.1} parent=1 // pred_fallthru
      _
    %360 = vsyncpa [#allocation4], 1
    %361 = vsyncpa [#allocation7], 1
    %362 = vsyncpa [#allocation5], 1

</llo_original>
